<compile_context>
chip_gen: v5e
topology: v5e:2x2
jax: 0.10.0
libtpu: 0.0.40
codegen_flags: <defaults>
</compile_context>

<pallas_src>
import functools

import jax
import jax.numpy as jnp
from jax.experimental import pallas as pl
from jax.experimental.pallas import tpu as pltpu

LOG_STD_MAX = 0.0
LOG_STD_MIN = -5.0


def _round_up(n, m):
    return ((n + m - 1) // m) * m


def _choose_block_b(b_rows, max_block_b):
    """Pick a batch tile (multiple of 8) minimizing padding + per-step overhead.

    b_rows is the batch already rounded up to a multiple of 8.  The tile is
    capped at ~half the batch (when the batch allows) so at least 2 grid blocks
    exist and both v7x TensorCores get work; per-grid-step overhead (~0.35 us)
    is modeled as ~512 rows' worth of streaming when trading off vs padding.
    """
    OVERHEAD_ROWS = 512
    cap = max(8, min(max_block_b, b_rows))
    if b_rows >= 16:
        cap = min(cap, max(8, _round_up((b_rows + 1) // 2, 8)))
    best_c, best_key = 8, None
    for c in range(8, cap + 1, 8):
        padded = _round_up(b_rows, c)
        nb = padded // c
        key = (padded + nb * OVERHEAD_ROWS, -c)
        if best_key is None or key < best_key:
            best_key, best_c = key, c
    return best_c


def _policy_kernel(x_ref, w1_ref, b1_ref, wh_ref, bh_ref, out_ref, *, out_c):
    # Hidden layer: relu(x @ W1 + b1). Cast activations to the weight dtype
    # (bf16 or f32) so the MXU sees one clean pass; accumulate in f32.
    x = x_ref[...].astype(w1_ref.dtype)
    h = jnp.dot(x, w1_ref[...], preferred_element_type=jnp.float32) + b1_ref[...]
    h = jnp.maximum(h, 0.0)

    # Fused heads: one matmul against the concatenated [Wm | Wl | Wd | pad] RHS.
    z = (jnp.dot(h.astype(wh_ref.dtype), wh_ref[...],
                 preferred_element_type=jnp.float32) + bh_ref[...])

    # Per-column-segment activations with a SINGLE transcendental slab:
    #   sigmoid(z) = 0.5 * (tanh(0.5 * z) + 1)
    col = jax.lax.broadcasted_iota(jnp.int32, z.shape, 1)
    is_mean = col < out_c
    t = jnp.tanh(jnp.where(is_mean, 0.5 * z, z))
    mean_act = 0.5 * (t + 1.0)
    logstd_act = LOG_STD_MIN + 0.5 * (LOG_STD_MAX - LOG_STD_MIN) * (t + 1.0)
    out = jnp.where(is_mean, mean_act,
                    jnp.where(col < 2 * out_c, logstd_act, z))
    out_ref[...] = out.astype(out_ref.dtype)


def policy_forward(x, params, weight_dtype=jnp.bfloat16, max_block_b=2048):
    """Policypower512 forward pass in one Pallas kernel call.

    Returns (mean, log_std, pi_d) with shapes (B, out_c), (B, out_c), (B, out_d).
    """
    B, D_in = x.shape
    H = params["w1"].shape[1]
    out_c = params["wm"].shape[1]
    out_d = params["wd"].shape[1]

    # Lane-dense fused-head width (kept at 128 deliberately; do not widen).
    N = 2 * out_c + out_d
    N_pad = _round_up(max(N, 128), 128)

    # Batch tiling: pad B only to a multiple of 8, then pick a tile that
    # minimizes padding waste + per-step overhead (and gives >=2 blocks when
    # possible, so both v7x TensorCores are used).
    Bp8 = _round_up(B, 8)
    block_B = _choose_block_b(Bp8, max_block_b)
    Bp = _round_up(Bp8, block_B)
    nb = Bp // block_B

    # Operands: x keeps its natural feature width (no K=128 zero-pad pass).
    x_f32 = x.astype(jnp.float32)
    x_p = x_f32 if Bp == B else jnp.zeros((Bp, D_in), jnp.float32).at[:B].set(x_f32)
    w1 = params["w1"].astype(weight_dtype)                                   # (D_in, H)
    b1 = params["b1"].astype(jnp.float32)                                    # (1, H)
    wh = jnp.concatenate([params["wm"], params["wl"], params["wd"]], axis=1)
    wh_p = jnp.zeros((H, N_pad), jnp.float32).at[:, :N].set(wh).astype(weight_dtype)
    bh = jnp.concatenate([params["bm"], params["bl"], params["bd"]], axis=1)
    bh_p = jnp.zeros((1, N_pad), jnp.float32).at[:, :N].set(bh)

    w_bytes = jnp.dtype(weight_dtype).itemsize
    cost = pl.CostEstimate(
        flops=2 * Bp * (D_in * H + H * N_pad),
        transcendentals=Bp * N_pad,              # single tanh slab
        bytes_accessed=(x_p.size * 4 + w1.size * w_bytes + b1.size * 4
                        + wh_p.size * w_bytes + bh_p.size * 4 + Bp * N_pad * 4),
    )

    kernel = functools.partial(_policy_kernel, out_c=out_c)
    out = pl.pallas_call(
        kernel,
        grid=(nb,),
        in_specs=[
            pl.BlockSpec((block_B, D_in), lambda i: (i, 0)),  # x (tiled over batch)
            pl.BlockSpec((D_in, H), lambda i: (0, 0)),        # W1 (resident)
            pl.BlockSpec((1, H), lambda i: (0, 0)),           # b1
            pl.BlockSpec((H, N_pad), lambda i: (0, 0)),       # fused head weights
            pl.BlockSpec((1, N_pad), lambda i: (0, 0)),       # fused head bias
        ],
        out_specs=pl.BlockSpec((block_B, N_pad), lambda i: (i, 0)),
        out_shape=jax.ShapeDtypeStruct((Bp, N_pad), jnp.float32),
        compiler_params=pltpu.CompilerParams(dimension_semantics=("parallel",)),
        cost_estimate=cost,
    )(x_p, w1, b1, wh_p, bh_p)

    mean = out[:B, :out_c]
    log_std = out[:B, out_c:2 * out_c]
    pi_d = out[:B, 2 * out_c:2 * out_c + out_d]
    return mean, log_std, pi_d


def init_params(key, input_shape, out_c, out_d, hidden=512):
    """Deterministic synthetic parameter init (f32 master copies)."""
    ks = jax.random.split(key, 8)
    scale1 = 1.0 / jnp.sqrt(input_shape)
    scale2 = 1.0 / jnp.sqrt(hidden)
    return {
        "w1": jax.random.normal(ks[0], (input_shape, hidden), jnp.float32) * scale1,
        "b1": jnp.zeros((1, hidden), jnp.float32),
        "wm": jax.random.normal(ks[1], (hidden, out_c), jnp.float32) * scale2,
        "bm": jax.random.normal(ks[2], (1, out_c), jnp.float32) * 0.01,
        "wl": jax.random.normal(ks[3], (hidden, out_c), jnp.float32) * scale2,
        "bl": jax.random.normal(ks[4], (1, out_c), jnp.float32) * 0.01,
        "wd": jax.random.normal(ks[5], (hidden, out_d), jnp.float32) * scale2,
        "bd": jax.random.normal(ks[6], (1, out_d), jnp.float32) * 0.01,
    }


def reference_forward(x, p):
    h = jnp.maximum(x @ p["w1"] + p["b1"], 0.0)
    mean = jax.nn.sigmoid(h @ p["wm"] + p["bm"])
    log_std = jnp.tanh(h @ p["wl"] + p["bl"])
    log_std = LOG_STD_MIN + 0.5 * (LOG_STD_MAX - LOG_STD_MIN) * (log_std + 1.0)
    pi_d = h @ p["wd"] + p["bd"]
    return mean, log_std, pi_d


# TODO(synk): get_action() (Normal/Categorical sampling) and checkpoint I/O are
# outside the forward pass and are not implemented as Pallas kernels.

if __name__ == "__main__":
    key = jax.random.PRNGKey(0)
    kx, kx2, kp = jax.random.split(key, 3)

    input_shape, out_c, out_d = 32, 4, 6
    params = init_params(kp, input_shape, out_c, out_d)

    # ---- Small batch (single grid block) --------------------------------
    B = 8
    x = jax.random.normal(kx, (B, input_shape), jnp.float32)
    r_mean, r_log_std, r_pi_d = reference_forward(x, params)

    # Strict check with f32 weights (exact module semantics).
    mean, log_std, pi_d = policy_forward(x, params, weight_dtype=jnp.float32)
    jax.block_until_ready((mean, log_std, pi_d))
    assert mean.shape == (B, out_c) and log_std.shape == (B, out_c) and pi_d.shape == (B, out_d)
    assert jnp.allclose(mean, r_mean, atol=1e-5, rtol=1e-5)
    assert jnp.allclose(log_std, r_log_std, atol=1e-5, rtol=1e-5)
    assert jnp.allclose(pi_d, r_pi_d, atol=1e-5, rtol=1e-5)

    # bf16 weight storage (halved weight DMA), f32 accumulation — looser tolerance.
    mean_b, log_std_b, pi_d_b = policy_forward(x, params, weight_dtype=jnp.bfloat16)
    jax.block_until_ready((mean_b, log_std_b, pi_d_b))
    assert jnp.allclose(mean_b, r_mean, atol=5e-2, rtol=5e-2)
    assert jnp.allclose(log_std_b, r_log_std, atol=5e-2, rtol=5e-2)
    assert jnp.allclose(pi_d_b, r_pi_d, atol=5e-2, rtol=5e-2)

    # ---- Non-divisible batch (exercises multi-block grid + row padding) ---
    B2 = 40
    x2 = jax.random.normal(kx2, (B2, input_shape), jnp.float32)
    r2 = reference_forward(x2, params)
    o2 = policy_forward(x2, params, weight_dtype=jnp.float32)
    jax.block_until_ready(o2)
    for got, ref in zip(o2, r2):
        assert got.shape == ref.shape
        assert jnp.allclose(got, ref, atol=1e-5, rtol=1e-5)

    print("KERNEL_OK")
</pallas_src>

<mosaic_0001>
module attributes {stable_mosaic.version = 11 : i64} {
  func.func @_policy_kernel(%arg0: i32, %arg1: memref<8x32xf32, #tpu.memory_space<vmem>>, %arg2: memref<32x512xf32, #tpu.memory_space<vmem>>, %arg3: memref<1x512xf32, #tpu.memory_space<vmem>>, %arg4: memref<512x128xf32, #tpu.memory_space<vmem>>, %arg5: memref<1x128xf32, #tpu.memory_space<vmem>>, %arg6: memref<8x128xf32, #tpu.memory_space<vmem>>) attributes {dimension_semantics = [#tpu.dimension_semantics<parallel>], iteration_bounds = array<i64: 1>, scalar_prefetch = 0 : i64, scratch_operands = 0 : i64, tpu.core_type = #tpu.core_type<tc>, window_params = [{transform_indices = @transform_0, window_bounds = array<i64: 8, 32>}, {pipeline_mode = #tpu.pipeline_mode<synchronous>, transform_indices = @transform_1, window_bounds = array<i64: 32, 512>}, {pipeline_mode = #tpu.pipeline_mode<synchronous>, transform_indices = @transform_2, window_bounds = array<i64: 1, 512>}, {pipeline_mode = #tpu.pipeline_mode<synchronous>, transform_indices = @transform_3, window_bounds = array<i64: 512, 128>}, {pipeline_mode = #tpu.pipeline_mode<synchronous>, transform_indices = @transform_4, window_bounds = array<i64: 1, 128>}, {transform_indices = @transform_5, window_bounds = array<i64: 8, 128>}]} {
    %c0 = arith.constant 0 : index
    %c0_0 = arith.constant 0 : index
    %0 = vector.load %arg1[%c0, %c0_0] : memref<8x32xf32, #tpu.memory_space<vmem>>, vector<8x32xf32>
    %c0_1 = arith.constant 0 : index
    %c0_2 = arith.constant 0 : index
    %1 = vector.load %arg2[%c0_1, %c0_2] : memref<32x512xf32, #tpu.memory_space<vmem>>, vector<32x512xf32>
    %cst = arith.constant dense<0.000000e+00> : vector<8x512xf32>
    %2 = tpu.matmul %0, %1, %cst {dimension_numbers = #tpu.dot_dimension_numbers<[1], [0], [0], [1], [0, 0, 1, 1], [], []>} : vector<8x32xf32>, vector<32x512xf32>, vector<8x512xf32> -> vector<8x512xf32>
    %c0_3 = arith.constant 0 : index
    %c0_4 = arith.constant 0 : index
    %3 = vector.load %arg3[%c0_3, %c0_4] : memref<1x512xf32, #tpu.memory_space<vmem>>, vector<1x512xf32>
    %4 = vector.broadcast %3 : vector<1x512xf32> to vector<8x512xf32>
    %5 = arith.addf %2, %4 : vector<8x512xf32>
    %cst_5 = arith.constant 0.000000e+00 : f32
    %6 = vector.broadcast %cst_5 : f32 to vector<8x512xf32>
    %7 = arith.maximumf %5, %6 : vector<8x512xf32>
    %c0_6 = arith.constant 0 : index
    %c0_7 = arith.constant 0 : index
    %8 = vector.load %arg4[%c0_6, %c0_7] : memref<512x128xf32, #tpu.memory_space<vmem>>, vector<512x128xf32>
    %cst_8 = arith.constant dense<0.000000e+00> : vector<8x128xf32>
    %9 = tpu.matmul %7, %8, %cst_8 {dimension_numbers = #tpu.dot_dimension_numbers<[1], [0], [0], [1], [0, 0, 1, 1], [], []>} : vector<8x512xf32>, vector<512x128xf32>, vector<8x128xf32> -> vector<8x128xf32>
    %c0_9 = arith.constant 0 : index
    %c0_10 = arith.constant 0 : index
    %10 = vector.load %arg5[%c0_9, %c0_10] : memref<1x128xf32, #tpu.memory_space<vmem>>, vector<1x128xf32>
    %11 = vector.broadcast %10 : vector<1x128xf32> to vector<8x128xf32>
    %12 = arith.addf %9, %11 : vector<8x128xf32>
    %13 = tpu.iota {dimensions = array<i32: 1>} : vector<8x128xi32>
    %c4_i32 = arith.constant 4 : i32
    %14 = vector.broadcast %c4_i32 : i32 to vector<8x128xi32>
    %15 = arith.cmpi slt, %13, %14 : vector<8x128xi32>
    %cst_11 = arith.constant 5.000000e-01 : f32
    %16 = vector.broadcast %cst_11 : f32 to vector<8x128xf32>
    %17 = arith.mulf %16, %12 : vector<8x128xf32>
    %18 = arith.select %15, %17, %12 : vector<8x128xi1>, vector<8x128xf32>
    %19 = math.tanh %18 : vector<8x128xf32>
    %cst_12 = arith.constant 1.000000e+00 : f32
    %20 = vector.broadcast %cst_12 : f32 to vector<8x128xf32>
    %21 = arith.addf %19, %20 : vector<8x128xf32>
    %cst_13 = arith.constant 5.000000e-01 : f32
    %22 = vector.broadcast %cst_13 : f32 to vector<8x128xf32>
    %23 = arith.mulf %22, %21 : vector<8x128xf32>
    %cst_14 = arith.constant 1.000000e+00 : f32
    %24 = vector.broadcast %cst_14 : f32 to vector<8x128xf32>
    %25 = arith.addf %19, %24 : vector<8x128xf32>
    %cst_15 = arith.constant 2.500000e+00 : f32
    %26 = vector.broadcast %cst_15 : f32 to vector<8x128xf32>
    %27 = arith.mulf %26, %25 : vector<8x128xf32>
    %cst_16 = arith.constant -5.000000e+00 : f32
    %28 = vector.broadcast %cst_16 : f32 to vector<8x128xf32>
    %29 = arith.addf %28, %27 : vector<8x128xf32>
    %c8_i32 = arith.constant 8 : i32
    %30 = vector.broadcast %c8_i32 : i32 to vector<8x128xi32>
    %31 = arith.cmpi slt, %13, %30 : vector<8x128xi32>
    %32 = arith.select %31, %29, %12 : vector<8x128xi1>, vector<8x128xf32>
    %33 = arith.select %15, %23, %32 : vector<8x128xi1>, vector<8x128xf32>
    %c0_17 = arith.constant 0 : index
    %c0_18 = arith.constant 0 : index
    %34 = vector.load %arg6[%c0_17, %c0_18] : memref<8x128xf32, #tpu.memory_space<vmem>>, vector<8x128xf32>
    tpu.vector_store %arg6[%c0_17, %c0_18], %33 {strides = array<i32>} : memref<8x128xf32, #tpu.memory_space<vmem>>, vector<8x128xf32>,
    return
  }
  func.func @transform_0(%arg0: i32) -> (i32, i32) {
    %c0_i32 = arith.constant 0 : i32
    %c0_i32_0 = arith.constant 0 : i32
    return %arg0, %c0_i32 : i32, i32
  }
  func.func @transform_1(%arg0: i32) -> (i32, i32) {
    %c0_i32 = arith.constant 0 : i32
    %c0_i32_0 = arith.constant 0 : i32
    %c0_i32_1 = arith.constant 0 : i32
    return %c0_i32, %c0_i32_0 : i32, i32
  }
  func.func @transform_2(%arg0: i32) -> (i32, i32) {
    %c0_i32 = arith.constant 0 : i32
    %c0_i32_0 = arith.constant 0 : i32
    %c0_i32_1 = arith.constant 0 : i32
    return %c0_i32, %c0_i32_0 : i32, i32
  }
  func.func @transform_3(%arg0: i32) -> (i32, i32) {
    %c0_i32 = arith.constant 0 : i32
    %c0_i32_0 = arith.constant 0 : i32
    %c0_i32_1 = arith.constant 0 : i32
    return %c0_i32, %c0_i32_0 : i32, i32
  }
  func.func @transform_4(%arg0: i32) -> (i32, i32) {
    %c0_i32 = arith.constant 0 : i32
    %c0_i32_0 = arith.constant 0 : i32
    %c0_i32_1 = arith.constant 0 : i32
    return %c0_i32, %c0_i32_0 : i32, i32
  }
  func.func @transform_5(%arg0: i32) -> (i32, i32) {
    %c0_i32 = arith.constant 0 : i32
    %c0_i32_0 = arith.constant 0 : i32
    return %arg0, %c0_i32 : i32, i32
  }
}

</mosaic_0001>

<llo_original>
// kernel: tpu_custom_call.1
$region0: #{tpu_custom_call.1}
  #allocation0 [shape = 'u32[]', space=smem, size = 0x4, offset = 0x4, fixed_abs, tag = 'smem constant byte address 0x4 - core index']
  #allocation1 [shape = 'u32[72,128]{1,0:T(1,128)}', space=vmem, size = 0x9000, scoped, tag = 'internal scratch']
  %s0 = inlined_call_operand.hbm [shape: f32[8,32], index: 0, kind: input, shape index: {}]
  %s1 = inlined_call_operand.hbm [shape: f32[32,512], index: 1, kind: input, shape index: {}]
  %s2 = inlined_call_operand.hbm [shape: f32[1,512], index: 2, kind: input, shape index: {}]
  %s3 = inlined_call_operand.hbm [shape: f32[512,128], index: 3, kind: input, shape index: {}]
  %s4 = inlined_call_operand.vmem [shape: f32[1,128], index: 4, kind: input, shape index: {}]
  %s5 = inlined_call_operand.hbm [shape: f32[8,128], index: 5, kind: output, shape index: {}]
  %s6 = sld [smem:[#allocation0]]
  $region46: #{tpu_custom_call.1} parent=0
    _
  %s8 = ssub.s32 1, %s6
  %s9 = scalar_select 0, %s8, %s6
  $region1: #{tpu_custom_call.1} parent=0
    #allocation2 [shape = 'u8[4096]{0}', space=vmem, size = 0x1000, scoped, tag = 'input window, operand 0, single buffered']
    #allocation3 [shape = 's32[1]{0}', space=sflag, size = 0x4, scoped, tag = 'scoped memory for tpu_custom_call.1']
    #allocation4 [shape = 's32[1]{0}', space=sflag, size = 0x4, scoped, tag = 'scoped memory for tpu_custom_call.1']
    #allocation5 [shape = 'u8[65536]{0}', space=vmem, size = 0x10000, scoped, tag = 'input window, operand 1, single buffered']
    #allocation6 [shape = 's32[1]{0}', space=sflag, size = 0x4, scoped, tag = 'scoped memory for tpu_custom_call.1']
    #allocation7 [shape = 'u8[2048]{0}', space=vmem, size = 0x800, scoped, tag = 'input window, operand 2, single buffered']
    #allocation8 [shape = 'u8[262144]{0}', space=vmem, size = 0x40000, scoped, tag = 'input window, operand 3, single buffered']
    #allocation9 [shape = 's32[1]{0}', space=sflag, size = 0x4, scoped, tag = 'scoped memory for tpu_custom_call.1']
    #allocation10 [shape = 'u8[4096]{0}', space=vmem, size = 0x1000, scoped, tag = 'output window, operand 0, single buffered']
    %10 = vsyncpa [#allocation3], 0
    %11 = vsyncpa [#allocation6], 0
    %12 = vsyncpa [#allocation9], 0
    %13 = vsyncpa [#allocation4], 0
    // Predicated region
    $region2: #{tpu_custom_call.1} parent=1 // pred_check
      _
    $region3: #{tpu_custom_call.1} parent=1 // pred_check_branch
      %15 = sbr.rel (0) target = $region5
    $region4: #{tpu_custom_call.1} parent=1 // pred_region
      %17 = vsyncadd [#allocation3], 0
      %s19 = sshll.u32 %s0, 4
      %s20 = int_to_ptr.hbm [resolvable:$true] %s19
      %s21 = sshll.u32 [#allocation2], 4
      %s22 = int_to_ptr.vmem [resolvable:$true] %s21
      %24 = dma.hbm_to_vmem [thread:$0]  %s20, 128, %s22, [#allocation3]
    $region5: #{tpu_custom_call.1} parent=1 // pred_fallthru
      _
    // Predicated region
    $region6: #{tpu_custom_call.1} parent=1 // pred_check
      _
    $region7: #{tpu_custom_call.1} parent=1 // pred_check_branch
      %26 = sbr.rel (0) target = $region9
    $region8: #{tpu_custom_call.1} parent=1 // pred_region
      %28 = vsyncadd [#allocation6], 0
      %s29 = sshll.u32 %s1, 4
      %s30 = int_to_ptr.hbm [resolvable:$true] %s29
      %s31 = sshll.u32 [#allocation5], 4
      %s32 = int_to_ptr.vmem [resolvable:$true] %s31
      %37 = dma.hbm_to_vmem [thread:$0]  %s30, 2048, %s32, [#allocation6], 512, 512, 32
    $region9: #{tpu_custom_call.1} parent=1 // pred_fallthru
      _
    // Predicated region
    $region10: #{tpu_custom_call.1} parent=1 // pred_check
      _
    $region11: #{tpu_custom_call.1} parent=1 // pred_check_branch
      %39 = sbr.rel (0) target = $region13
    $region12: #{tpu_custom_call.1} parent=1 // pred_region
      %41 = vsyncadd [#allocation6], 0
      %s43 = sshll.u32 %s2, 4
      %s44 = int_to_ptr.hbm [resolvable:$true] %s43
      %s45 = sshll.u32 [#allocation7], 4
      %s46 = int_to_ptr.vmem [resolvable:$true] %s45
      %48 = dma.hbm_to_vmem [thread:$0]  %s44, 64, %s46, [#allocation6]
    $region13: #{tpu_custom_call.1} parent=1 // pred_fallthru
      _
    // Predicated region
    $region14: #{tpu_custom_call.1} parent=1 // pred_check
      _
    $region15: #{tpu_custom_call.1} parent=1 // pred_check_branch
      %50 = sbr.rel (0) target = $region17
    $region16: #{tpu_custom_call.1} parent=1 // pred_region
      %52 = vsyncadd [#allocation9], 0
      %s53 = sshll.u32 %s3, 4
      %s54 = int_to_ptr.hbm [resolvable:$true] %s53
      %s55 = sshll.u32 [#allocation8], 4
      %s56 = int_to_ptr.vmem [resolvable:$true] %s55
      %61 = dma.hbm_to_vmem [thread:$0]  %s54, 8192, %s56, [#allocation9], 128, 128, 8
    $region17: #{tpu_custom_call.1} parent=1 // pred_fallthru
      _
    // Predicated region
    $region18: #{tpu_custom_call.1} parent=1 // pred_check
      _
    $region19: #{tpu_custom_call.1} parent=1 // pred_check_branch
      %63 = sbr.rel (0) target = $region21
    $region20: #{tpu_custom_call.1} parent=1 // pred_region
      _
    $region21: #{tpu_custom_call.1} parent=1 // pred_fallthru
      _
    // Predicated region
    $region22: #{tpu_custom_call.1} parent=1 // pred_check
      _
    $region23: #{tpu_custom_call.1} parent=1 // pred_check_branch
      %65 = sbr.rel (0) target = $region25
    $region24: #{tpu_custom_call.1} parent=1 // pred_region
      %67 = dma.done [#allocation3], 128
    $region25: #{tpu_custom_call.1} parent=1 // pred_fallthru
      _
    // Predicated region
    $region26: #{tpu_custom_call.1} parent=1 // pred_check
      _
    $region27: #{tpu_custom_call.1} parent=1 // pred_check_branch
      %69 = sbr.rel (0) target = $region29
    $region28: #{tpu_custom_call.1} parent=1 // pred_region
      %71 = dma.done [#allocation6], 2048
    $region29: #{tpu_custom_call.1} parent=1 // pred_fallthru
      _
    // Predicated region
    $region30: #{tpu_custom_call.1} parent=1 // pred_check
      _
    $region31: #{tpu_custom_call.1} parent=1 // pred_check_branch
      %73 = sbr.rel (0) target = $region33
    $region32: #{tpu_custom_call.1} parent=1 // pred_region
      %75 = dma.done [#allocation6], 64
    $region33: #{tpu_custom_call.1} parent=1 // pred_fallthru
      _
    // Predicated region
    $region34: #{tpu_custom_call.1} parent=1 // pred_check
      _
    $region35: #{tpu_custom_call.1} parent=1 // pred_check_branch
      %77 = sbr.rel (0) target = $region37
    $region36: #{tpu_custom_call.1} parent=1 // pred_region
      %79 = dma.done [#allocation9], 8192
    $region37: #{tpu_custom_call.1} parent=1 // pred_fallthru
      _
    %v80 = vld [vmem:[#allocation2] sm:$0xff]
    %v81 = vld [vmem:[#allocation5] sm:$0xff]
    %v82 = vld [vmem:[#allocation5 + $0x8] sm:$0xff]
    %v83 = vld [vmem:[#allocation5 + $0x10] sm:$0xff]
    %v84 = vld [vmem:[#allocation5 + $0x18] sm:$0xff]
    %v85 = vld [vmem:[#allocation5 + $0x20] sm:$0xff]
    %v86 = vld [vmem:[#allocation5 + $0x28] sm:$0xff]
    %v87 = vld [vmem:[#allocation5 + $0x30] sm:$0xff]
    %v88 = vld [vmem:[#allocation5 + $0x38] sm:$0xff]
    %v89 = vld [vmem:[#allocation5 + $0x40] sm:$0xff]
    %v90 = vld [vmem:[#allocation5 + $0x48] sm:$0xff]
    %v91 = vld [vmem:[#allocation5 + $0x50] sm:$0xff]
    %v92 = vld [vmem:[#allocation5 + $0x58] sm:$0xff]
    %v93 = vld [vmem:[#allocation5 + $0x60] sm:$0xff]
    %v94 = vld [vmem:[#allocation5 + $0x68] sm:$0xff]
    %v95 = vld [vmem:[#allocation5 + $0x70] sm:$0xff]
    %v96 = vld [vmem:[#allocation5 + $0x78] sm:$0xff]
    %v97 = vld [vmem:[#allocation7] sm:$0xf]
    %v99 = vperm.slane %v97, 0
    %v100 = vperm.slane %v97, 1
    %v101 = vperm.slane %v97, 2
    %v102 = vperm.slane %v97, 3
    %vm107 = vcmask 261120
    %v109 = vsel %vm107, %v80, 0
    %111 = vmatpush.msra.mxu0 0.0
    %112 = vmatpush.msra.mxu0 0.0
    %113 = vmatpush.msra.mxu0 0.0
    %114 = vmatpush.msra.mxu0 0.0
    %115 = vmatpush.msra.mxu0 0.0
    %116 = vmatpush.msra.mxu0 0.0
    %117 = vmatpush.msra.mxu0 0.0
    %118 = vmatpush.msra.mxu0 0.0
    %119 = vmatpush.msra.mxu0 0.0
    %120 = vmatpush.msra.mxu0 0.0
    %121 = vmatpush.msra.mxu0 0.0
    %122 = vmatpush.msra.mxu0 0.0
    %123 = vmatpush.msra.mxu0 %v93
    %124 = vmatpush.msra.mxu0 %v89
    %125 = vmatpush.msra.mxu0 %v85
    %126 = vmatpush.msra.mxu0 %v81
    %127 = vmatmul.f32.gmra.mxu0 %v109
    %v128 = vpop.f32.mrf.mxu0
    %v129 = vadd.f32 %v99, %v128
    %130 = vdwg.mxu0
    %131 = vmatpush.msra.mxu0 0.0
    %132 = vmatpush.msra.mxu0 0.0
    %133 = vmatpush.msra.mxu0 0.0
    %134 = vmatpush.msra.mxu0 0.0
    %135 = vmatpush.msra.mxu0 0.0
    %136 = vmatpush.msra.mxu0 0.0
    %137 = vmatpush.msra.mxu0 0.0
    %138 = vmatpush.msra.mxu0 0.0
    %139 = vmatpush.msra.mxu0 0.0
    %140 = vmatpush.msra.mxu0 0.0
    %141 = vmatpush.msra.mxu0 0.0
    %142 = vmatpush.msra.mxu0 0.0
    %143 = vmatpush.msra.mxu0 %v94
    %144 = vmatpush.msra.mxu0 %v90
    %145 = vmatpush.msra.mxu0 %v86
    %146 = vmatpush.msra.mxu0 %v82
    %147 = vmatmul.f32.gmra.mxu0 %v109
    %v148 = vpop.f32.mrf.mxu0
    %v149 = vadd.f32 %v100, %v148
    %150 = vdwg.mxu0
    %151 = vmatpush.msra.mxu0 0.0
    %152 = vmatpush.msra.mxu0 0.0
    %153 = vmatpush.msra.mxu0 0.0
    %154 = vmatpush.msra.mxu0 0.0
    %155 = vmatpush.msra.mxu0 0.0
    %156 = vmatpush.msra.mxu0 0.0
    %157 = vmatpush.msra.mxu0 0.0
    %158 = vmatpush.msra.mxu0 0.0
    %159 = vmatpush.msra.mxu0 0.0
    %160 = vmatpush.msra.mxu0 0.0
    %161 = vmatpush.msra.mxu0 0.0
    %162 = vmatpush.msra.mxu0 0.0
    %163 = vmatpush.msra.mxu0 %v95
    %164 = vmatpush.msra.mxu0 %v91
    %165 = vmatpush.msra.mxu0 %v87
    %166 = vmatpush.msra.mxu0 %v83
    %167 = vmatmul.f32.gmra.mxu0 %v109
    %v168 = vpop.f32.mrf.mxu0
    %v169 = vadd.f32 %v101, %v168
    %170 = vdwg.mxu0
    %171 = vmatpush.msra.mxu0 0.0
    %172 = vmatpush.msra.mxu0 0.0
    %173 = vmatpush.msra.mxu0 0.0
    %174 = vmatpush.msra.mxu0 0.0
    %175 = vmatpush.msra.mxu0 0.0
    %176 = vmatpush.msra.mxu0 0.0
    %177 = vmatpush.msra.mxu0 0.0
    %178 = vmatpush.msra.mxu0 0.0
    %179 = vmatpush.msra.mxu0 0.0
    %180 = vmatpush.msra.mxu0 0.0
    %181 = vmatpush.msra.mxu0 0.0
    %182 = vmatpush.msra.mxu0 0.0
    %183 = vmatpush.msra.mxu0 %v96
    %184 = vmatpush.msra.mxu0 %v92
    %185 = vmatpush.msra.mxu0 %v88
    %186 = vmatpush.msra.mxu0 %v84
    %187 = vmatmul.f32.gmra.mxu0 %v109
    %v188 = vpop.f32.mrf.mxu0
    %v189 = vadd.f32 %v102, %v188
    %190 = vdwg.mxu0
    %v191 = vmax.f32 %v129, 0.0
    %v192 = vmax.f32 %v149, 0.0
    %v193 = vmax.f32 %v169, 0.0
    %v194 = vmax.f32 %v189, 0.0
    %v195 = vld [vmem:[#allocation8] sm:$0xff]
    %v196 = vld [vmem:[#allocation8 + $0x8] sm:$0xff]
    %v197 = vld [vmem:[#allocation8 + $0x10] sm:$0xff]
    %v198 = vld [vmem:[#allocation8 + $0x18] sm:$0xff]
    %v199 = vld [vmem:[#allocation8 + $0x20] sm:$0xff]
    %v200 = vld [vmem:[#allocation8 + $0x28] sm:$0xff]
    %v201 = vld [vmem:[#allocation8 + $0x30] sm:$0xff]
    %v202 = vld [vmem:[#allocation8 + $0x38] sm:$0xff]
    %v203 = vld [vmem:[#allocation8 + $0x40] sm:$0xff]
    %v204 = vld [vmem:[#allocation8 + $0x48] sm:$0xff]
    %v205 = vld [vmem:[#allocation8 + $0x50] sm:$0xff]
    %v206 = vld [vmem:[#allocation8 + $0x58] sm:$0xff]
    %v207 = vld [vmem:[#allocation8 + $0x60] sm:$0xff]
    %v208 = vld [vmem:[#allocation8 + $0x68] sm:$0xff]
    %v209 = vld [vmem:[#allocation8 + $0x70] sm:$0xff]
    %v210 = vld [vmem:[#allocation8 + $0x78] sm:$0xff]
    %v211 = vld [vmem:[#allocation8 + $0x80] sm:$0xff]
    %v212 = vld [vmem:[#allocation8 + $0x88] sm:$0xff]
    %v213 = vld [vmem:[#allocation8 + $0x90] sm:$0xff]
    %v214 = vld [vmem:[#allocation8 + $0x98] sm:$0xff]
    %v215 = vld [vmem:[#allocation8 + $0xa0] sm:$0xff]
    %v216 = vld [vmem:[#allocation8 + $0xa8] sm:$0xff]
    %v217 = vld [vmem:[#allocation8 + $0xb0] sm:$0xff]
    %v218 = vld [vmem:[#allocation8 + $0xb8] sm:$0xff]
    %v219 = vld [vmem:[#allocation8 + $0xc0] sm:$0xff]
    %v220 = vld [vmem:[#allocation8 + $0xc8] sm:$0xff]
    %v221 = vld [vmem:[#allocation8 + $0xd0] sm:$0xff]
    %v222 = vld [vmem:[#allocation8 + $0xd8] sm:$0xff]
    %v223 = vld [vmem:[#allocation8 + $0xe0] sm:$0xff]
    %v224 = vld [vmem:[#allocation8 + $0xe8] sm:$0xff]
    %v225 = vld [vmem:[#allocation8 + $0xf0] sm:$0xff]
    %v226 = vld [vmem:[#allocation8 + $0xf8] sm:$0xff]
    %v227 = vld [vmem:[#allocation8 + $0x100] sm:$0xff]
    %v228 = vld [vmem:[#allocation8 + $0x108] sm:$0xff]
    %v229 = vld [vmem:[#allocation8 + $0x110] sm:$0xff]
    %v230 = vld [vmem:[#allocation8 + $0x118] sm:$0xff]
    %v231 = vld [vmem:[#allocation8 + $0x120] sm:$0xff]
    %v232 = vld [vmem:[#allocation8 + $0x128] sm:$0xff]
    %v233 = vld [vmem:[#allocation8 + $0x130] sm:$0xff]
    %v234 = vld [vmem:[#allocation8 + $0x138] sm:$0xff]
    %v235 = vld [vmem:[#allocation8 + $0x140] sm:$0xff]
    %v236 = vld [vmem:[#allocation8 + $0x148] sm:$0xff]
    %v237 = vld [vmem:[#allocation8 + $0x150] sm:$0xff]
    %v238 = vld [vmem:[#allocation8 + $0x158] sm:$0xff]
    %v239 = vld [vmem:[#allocation8 + $0x160] sm:$0xff]
    %v240 = vld [vmem:[#allocation8 + $0x168] sm:$0xff]
    %v241 = vld [vmem:[#allocation8 + $0x170] sm:$0xff]
    %v242 = vld [vmem:[#allocation8 + $0x178] sm:$0xff]
    %v243 = vld [vmem:[#allocation8 + $0x180] sm:$0xff]
    %v244 = vld [vmem:[#allocation8 + $0x188] sm:$0xff]
    %v245 = vld [vmem:[#allocation8 + $0x190] sm:$0xff]
    %v246 = vld [vmem:[#allocation8 + $0x198] sm:$0xff]
    %v247 = vld [vmem:[#allocation8 + $0x1a0] sm:$0xff]
    %v248 = vld [vmem:[#allocation8 + $0x1a8] sm:$0xff]
    %v249 = vld [vmem:[#allocation8 + $0x1b0] sm:$0xff]
    %v250 = vld [vmem:[#allocation8 + $0x1b8] sm:$0xff]
    %v251 = vld [vmem:[#allocation8 + $0x1c0] sm:$0xff]
    %v252 = vld [vmem:[#allocation8 + $0x1c8] sm:$0xff]
    %v253 = vld [vmem:[#allocation8 + $0x1d0] sm:$0xff]
    %v254 = vld [vmem:[#allocation8 + $0x1d8] sm:$0xff]
    %v255 = vld [vmem:[#allocation8 + $0x1e0] sm:$0xff]
    %v256 = vld [vmem:[#allocation8 + $0x1e8] sm:$0xff]
    %v257 = vld [vmem:[#allocation8 + $0x1f0] sm:$0xff]
    %v258 = vld [vmem:[#allocation8 + $0x1f8] sm:$0xff]
    %v259 = vld [vmem:[%s4] sm:$0x1]
    %v261 = vperm.slane %v259, 0
    %263 = vmatpush.msra.mxu0 %v210
    %264 = vmatpush.msra.mxu0 %v209
    %265 = vmatpush.msra.mxu0 %v208
    %266 = vmatpush.msra.mxu0 %v207
    %267 = vmatpush.msra.mxu0 %v206
    %268 = vmatpush.msra.mxu0 %v205
    %269 = vmatpush.msra.mxu0 %v204
    %270 = vmatpush.msra.mxu0 %v203
    %271 = vmatpush.msra.mxu0 %v202
    %272 = vmatpush.msra.mxu0 %v201
    %273 = vmatpush.msra.mxu0 %v200
    %274 = vmatpush.msra.mxu0 %v199
    %275 = vmatpush.msra.mxu0 %v198
    %276 = vmatpush.msra.mxu0 %v197
    %277 = vmatpush.msra.mxu0 %v196
    %278 = vmatpush.msra.mxu0 %v195
    %279 = vmatmul.f32.gmra.mxu0 %v191
    %v280 = vpop.f32.mrf.mxu0
    %v281 = vadd.f32 %v261, %v280
    %282 = vdwg.mxu0
    %283 = vmatpush.msra.mxu0 %v226
    %284 = vmatpush.msra.mxu0 %v225
    %285 = vmatpush.msra.mxu0 %v224
    %286 = vmatpush.msra.mxu0 %v223
    %287 = vmatpush.msra.mxu0 %v222
    %288 = vmatpush.msra.mxu0 %v221
    %289 = vmatpush.msra.mxu0 %v220
    %290 = vmatpush.msra.mxu0 %v219
    %291 = vmatpush.msra.mxu0 %v218
    %292 = vmatpush.msra.mxu0 %v217
    %293 = vmatpush.msra.mxu0 %v216
    %294 = vmatpush.msra.mxu0 %v215
    %295 = vmatpush.msra.mxu0 %v214
    %296 = vmatpush.msra.mxu0 %v213
    %297 = vmatpush.msra.mxu0 %v212
    %298 = vmatpush.msra.mxu0 %v211
    %299 = vmatmul.f32.gmra.mxu0 %v192
    %v300 = vpop.f32.mrf.mxu0
    %v301 = vadd.f32 %v281, %v300
    %302 = vdwg.mxu0
    %303 = vmatpush.msra.mxu0 %v242
    %304 = vmatpush.msra.mxu0 %v241
    %305 = vmatpush.msra.mxu0 %v240
    %306 = vmatpush.msra.mxu0 %v239
    %307 = vmatpush.msra.mxu0 %v238
    %308 = vmatpush.msra.mxu0 %v237
    %309 = vmatpush.msra.mxu0 %v236
    %310 = vmatpush.msra.mxu0 %v235
    %311 = vmatpush.msra.mxu0 %v234
    %312 = vmatpush.msra.mxu0 %v233
    %313 = vmatpush.msra.mxu0 %v232
    %314 = vmatpush.msra.mxu0 %v231
    %315 = vmatpush.msra.mxu0 %v230
    %316 = vmatpush.msra.mxu0 %v229
    %317 = vmatpush.msra.mxu0 %v228
    %318 = vmatpush.msra.mxu0 %v227
    %319 = vmatmul.f32.gmra.mxu0 %v193
    %v320 = vpop.f32.mrf.mxu0
    %v321 = vadd.f32 %v301, %v320
    %322 = vdwg.mxu0
    %323 = vmatpush.msra.mxu0 %v258
    %324 = vmatpush.msra.mxu0 %v257
    %325 = vmatpush.msra.mxu0 %v256
    %326 = vmatpush.msra.mxu0 %v255
    %327 = vmatpush.msra.mxu0 %v254
    %328 = vmatpush.msra.mxu0 %v253
    %329 = vmatpush.msra.mxu0 %v252
    %330 = vmatpush.msra.mxu0 %v251
    %331 = vmatpush.msra.mxu0 %v250
    %332 = vmatpush.msra.mxu0 %v249
    %333 = vmatpush.msra.mxu0 %v248
    %334 = vmatpush.msra.mxu0 %v247
    %335 = vmatpush.msra.mxu0 %v246
    %336 = vmatpush.msra.mxu0 %v245
    %337 = vmatpush.msra.mxu0 %v244
    %338 = vmatpush.msra.mxu0 %v243
    %339 = vmatmul.f32.gmra.mxu0 %v194
    %v340 = vpop.f32.mrf.mxu0
    %v341 = vadd.f32 %v321, %v340
    %342 = vdwg.mxu0
    %v343 = vlaneseq
    %v344 = vand.u32 %v343, 127
    %vm345 = vcmp.lt.s32.totalorder %v344, 4
    %v346 = vmul.f32 %v341, 0.5
    %v347 = vsel %vm345, %v346, %v341
    %v348 = vtanh.pop %v347
    %v349 = vadd.f32 %v348, 1.0
    %v350 = vmul.f32 %v349, 0.5
    %v351 = vmul.f32 %v349, 2.5
    %v352 = vadd.f32 %v351, -5.0
    %vm353 = vcmp.lt.s32.totalorder %v344, 8
    %v354 = vsel %vm353, %v352, %v341
    %v355 = vsel %vm345, %v350, %v354
    %356 = vst [vmem:[#allocation10] sm:$0xff] %v355
    // Predicated region
    $region38: #{tpu_custom_call.1} parent=1 // pred_check
      _
    $region39: #{tpu_custom_call.1} parent=1 // pred_check_branch
      %358 = sbr.rel (0) target = $region41
    $region40: #{tpu_custom_call.1} parent=1 // pred_region
      %360 = vsyncadd [#allocation4], 0
      %s362 = sshll.u32 [#allocation10], 4
      %s363 = int_to_ptr.vmem [resolvable:$true] %s362
      %s364 = sshll.u32 %s5, 4
      %s365 = int_to_ptr.hbm [resolvable:$true] %s364
      %367 = dma.vmem_to_hbm [thread:$0]  %s363, 128, %s365, [#allocation4]
    $region41: #{tpu_custom_call.1} parent=1 // pred_fallthru
      _
    // Predicated region
    $region42: #{tpu_custom_call.1} parent=1 // pred_check
      _
    $region43: #{tpu_custom_call.1} parent=1 // pred_check_branch
      %369 = sbr.rel (0) target = $region45
    $region44: #{tpu_custom_call.1} parent=1 // pred_region
      %371 = dma.done [#allocation4], 128
    $region45: #{tpu_custom_call.1} parent=1 // pred_fallthru
      _
    %372 = vsyncpa [#allocation3], 1
    %373 = vsyncpa [#allocation6], 1
    %374 = vsyncpa [#allocation9], 1
    %375 = vsyncpa [#allocation4], 1

</llo_original>
